<compile_context>
chip_gen: v5e
topology: v5e:2x2
jax: 0.10.0
libtpu: 0.0.40
codegen_flags: <defaults>
</compile_context>

<pallas_src>
import math

import jax
import jax.numpy as jnp
from jax.experimental import pallas as pl
from jax.experimental.pallas import tpu as pltpu

_LANE = 128
_SUBLANE = 8


def _make_mse_kernel(rows, block_rows, steps, n_blocks, needs_mask, fold):
    """Sum-of-squared-diffs over a (rows, 128) slab; one partial block/chunk."""
    sub = block_rows // _SUBLANE if fold else 1
    ragged_last = (rows % block_rows) != 0
    # Blocks >= edge_start need special handling (mask or skip).
    edge_start = (n_blocks - 1) if ragged_last else n_blocks

    def _fold_sum(x):
        if fold:
            # (block_rows, 128) -> (8, 128): pure VALU tree of vreg adds.
            return jnp.sum(x.reshape(sub, _SUBLANE, _LANE), axis=0)
        # Tiny full-extent block whose row count is not a multiple of 8.
        return jnp.sum(x, axis=0, keepdims=True)

    def kernel(y_ref, gt_ref, out_ref):
        c = pl.program_id(0)   # parallel chunk axis (megacore / v7x)
        i = pl.program_id(1)   # sequential reduction axis within the chunk

        # Zero the chunk-resident output block at the start of each chunk.
        @pl.when(i == 0)
        def _():
            out_ref[...] = jnp.zeros_like(out_ref)

        d = y_ref[...].astype(jnp.float32) - gt_ref[...].astype(jnp.float32)
        d2 = d * d

        if not needs_mask:
            # No ragged last block and no padded grid steps: straight path.
            out_ref[...] += _fold_sum(d2)
        else:
            blk = c * steps + i

            # Interior blocks: no iota/compare/select.
            @pl.when(blk < edge_start)
            def _():
                out_ref[...] += _fold_sum(d2)

            if ragged_last:
                # Last real block: mask rows past `rows`.  Keep select
                # semantics -- OOB rows may hold Inf/NaN garbage.
                @pl.when(blk == n_blocks - 1)
                def _():
                    row_ids = (n_blocks - 1) * block_rows + \
                        jax.lax.broadcasted_iota(
                            jnp.int32, (block_rows, _LANE), 0)
                    out_ref[...] += _fold_sum(
                        jnp.where(row_ids < rows, d2, 0.0))
            # Padded grid steps (blk >= n_blocks) re-read the clamped last
            # block but contribute nothing.

    return kernel


def _num_chunks_hint():
    # Chunk parallelism only pays off when >1 TensorCore shares the grid
    # (megacore v4/v5p, or v7x).  Returning 1 is always correct & safe.
    try:
        kind = jax.devices()[0].device_kind.lower()
    except Exception:
        return 1
    for tag in ("v4", "v5p", "v7"):
        if tag in kind:
            return 2
    return 1


def _target_block_rows(itemsize):
    # ~2 MiB per input block (4 MiB on v7x): big enough to bury per-step
    # pipeline overhead, small enough that 2 inputs x 2 buffers fits every
    # chip's default scoped-VMEM limit.  Scales with dtype so bytes/step is
    # constant (bf16 -> 8192 rows, f32 -> 4096 rows).
    target_bytes = 2 << 20
    try:
        if "v7" in jax.devices()[0].device_kind.lower():
            target_bytes = 4 << 20
    except Exception:
        pass
    rows = target_bytes // (_LANE * itemsize)
    return max(_SUBLANE, (rows // _SUBLANE) * _SUBLANE)


def _mse_partial_sum(y2d, g2d, rows, block_rows, num_chunks):
    """Runs the Pallas kernel, returns sum((y2d - g2d)**2) as f32 scalar."""
    block_rows = min(block_rows, rows)
    if block_rows < rows:
        # Tiled case: keep block a multiple of the sublane tile.
        block_rows = max(_SUBLANE, (block_rows // _SUBLANE) * _SUBLANE)

    n_blocks = pl.cdiv(rows, block_rows)
    n_chunks = max(1, min(num_chunks, n_blocks))
    steps = pl.cdiv(n_blocks, n_chunks)

    fold = (block_rows % _SUBLANE) == 0
    ragged_last = (rows % block_rows) != 0
    has_padding = (n_blocks % n_chunks) != 0
    needs_mask = ragged_last or has_padding
    acc_rows = _SUBLANE if fold else 1   # per-chunk partial block rows

    def in_map(c, i):
        # Clamp so padded grid steps re-read the last valid block; the kernel
        # skips their contribution.
        return (jnp.minimum(c * steps + i, n_blocks - 1), 0)

    bytes_in = rows * _LANE * (y2d.dtype.itemsize + g2d.dtype.itemsize)
    partials = pl.pallas_call(
        _make_mse_kernel(rows, block_rows, steps, n_blocks, needs_mask, fold),
        out_shape=jax.ShapeDtypeStruct((n_chunks * acc_rows, _LANE),
                                       jnp.float32),
        grid_spec=pltpu.PrefetchScalarGridSpec(
            num_scalar_prefetch=0,
            grid=(n_chunks, steps),
            in_specs=[
                pl.BlockSpec((block_rows, _LANE), in_map),
                pl.BlockSpec((block_rows, _LANE), in_map),
            ],
            out_specs=pl.BlockSpec((acc_rows, _LANE), lambda c, i: (c, 0)),
        ),
        compiler_params=pltpu.CompilerParams(
            dimension_semantics=("parallel", "arbitrary"),
        ),
        cost_estimate=pl.CostEstimate(
            flops=3 * rows * _LANE,
            transcendentals=0,
            bytes_accessed=bytes_in + 4 * n_chunks * acc_rows * _LANE,
        ),
    )(y2d, g2d)

    # Tiny per-chunk partial slabs -> one cheap XLA reduce.
    return jnp.sum(partials)


def pixel_loss(y, gt, *, block_rows=None, num_chunks=None):
    """MSE loss: mean((y - gt)**2) over all elements, computed in Pallas."""
    assert y.shape == gt.shape, "y and gt must have the same shape"
    n_elem = math.prod(y.shape)

    if num_chunks is None:
        num_chunks = _num_chunks_hint()
    if block_rows is None:
        block_rows = _target_block_rows(y.dtype.itemsize)

    extra = jnp.float32(0.0)
    if n_elem % _LANE == 0:
        # Copy-free reshape to a lane-dense slab, native dtype.
        rows = n_elem // _LANE
        y2d = y.reshape(rows, _LANE)
        g2d = gt.reshape(rows, _LANE)
    else:
        # Lane-ragged tail (< 128 elements): kernel handles the 128-aligned
        # bulk; the tiny tail is summed in plain JAX.
        # TODO(synk): fold the tail into the kernel with an element-index
        # mask so the bulk slice below is not an extra copy.
        bulk = (n_elem // _LANE) * _LANE
        y_flat = jnp.ravel(y)
        g_flat = jnp.ravel(gt)
        td = (y_flat[bulk:].astype(jnp.float32)
              - g_flat[bulk:].astype(jnp.float32))
        extra = jnp.sum(td * td)
        if bulk == 0:
            return extra * (1.0 / n_elem)
        rows = bulk // _LANE
        y2d = y_flat[:bulk].reshape(rows, _LANE)
        g2d = g_flat[:bulk].reshape(rows, _LANE)

    total = _mse_partial_sum(y2d, g2d, rows, block_rows, num_chunks) + extra
    # Static element count -> compile-time reciprocal.
    return total * (1.0 / n_elem)


if __name__ == "__main__":
    key = jax.random.PRNGKey(0)
    ky, kg = jax.random.split(key)
    # NCHW, matching the PyTorch module's expected inputs.
    y = jax.random.normal(ky, (2, 4, 16, 16), dtype=jnp.float32)
    gt = jax.random.normal(kg, (2, 4, 16, 16), dtype=jnp.float32)

    loss = pixel_loss(y, gt)
    jax.block_until_ready(loss)

    # Reference check against plain JAX.
    ref = jnp.mean((y - gt) ** 2)
    assert jnp.allclose(loss, ref, rtol=1e-5, atol=1e-6), (loss, ref)

    print("KERNEL_OK")
</pallas_src>

<mosaic_0001>
module attributes {stable_mosaic.version = 11 : i64} {
  func.func @kernel(%arg0: i32, %arg1: i32, %arg2: memref<16x128xf32, #tpu.memory_space<vmem>>, %arg3: memref<16x128xf32, #tpu.memory_space<vmem>>, %arg4: memref<8x128xf32, #tpu.memory_space<vmem>>) attributes {dimension_semantics = [#tpu.dimension_semantics<parallel>, #tpu.dimension_semantics<arbitrary>], iteration_bounds = array<i64: 1, 1>, scalar_prefetch = 0 : i64, scratch_operands = 0 : i64, tpu.core_type = #tpu.core_type<tc>, window_params = [{transform_indices = @transform_0, window_bounds = array<i64: 16, 128>}, {transform_indices = @transform_1, window_bounds = array<i64: 16, 128>}, {transform_indices = @transform_2, window_bounds = array<i64: 8, 128>}]} {
    %c0_i32 = arith.constant 0 : i32
    %0 = arith.cmpi eq, %arg1, %c0_i32 : i32
    %1 = arith.extui %0 : i1 to i32
    %c0_i32_0 = arith.constant 0 : i32
    %2 = arith.cmpi ne, %1, %c0_i32_0 : i32
    scf.if %2 {
      %cst_8 = arith.constant 0.000000e+00 : f32
      %12 = vector.broadcast %cst_8 : f32 to vector<8x128xf32>
      %c0_9 = arith.constant 0 : index
      %c0_10 = arith.constant 0 : index
      %13 = vector.load %arg4[%c0_9, %c0_10] : memref<8x128xf32, #tpu.memory_space<vmem>>, vector<8x128xf32>
      tpu.vector_store %arg4[%c0_9, %c0_10], %12 {strides = array<i32>} : memref<8x128xf32, #tpu.memory_space<vmem>>, vector<8x128xf32>,
    } else {
    }
    %c0 = arith.constant 0 : index
    %c0_1 = arith.constant 0 : index
    %3 = vector.load %arg2[%c0, %c0_1] : memref<16x128xf32, #tpu.memory_space<vmem>>, vector<16x128xf32>
    %c0_2 = arith.constant 0 : index
    %c0_3 = arith.constant 0 : index
    %4 = vector.load %arg3[%c0_2, %c0_3] : memref<16x128xf32, #tpu.memory_space<vmem>>, vector<16x128xf32>
    %5 = arith.subf %3, %4 : vector<16x128xf32>
    %6 = arith.mulf %5, %5 : vector<16x128xf32>
    %c0_4 = arith.constant 0 : index
    %c0_5 = arith.constant 0 : index
    %7 = vector.load %arg4[%c0_4, %c0_5] : memref<8x128xf32, #tpu.memory_space<vmem>>, vector<8x128xf32>
    %8 = vector.shape_cast %6 : vector<16x128xf32> to vector<2x8x128xf32>
    %cst = arith.constant dense<0.000000e+00> : vector<8x128xf32>
    %9 = vector.multi_reduction <add>, %8, %cst [0] : vector<2x8x128xf32> to vector<8x128xf32>
    %10 = arith.addf %7, %9 : vector<8x128xf32>
    %c0_6 = arith.constant 0 : index
    %c0_7 = arith.constant 0 : index
    %11 = vector.load %arg4[%c0_6, %c0_7] : memref<8x128xf32, #tpu.memory_space<vmem>>, vector<8x128xf32>
    tpu.vector_store %arg4[%c0_6, %c0_7], %10 {strides = array<i32>} : memref<8x128xf32, #tpu.memory_space<vmem>>, vector<8x128xf32>,
    return
  }
  func.func @transform_0(%arg0: i32, %arg1: i32) -> (i32, i32) {
    %c1_i32 = arith.constant 1 : i32
    %0 = arith.muli %arg0, %c1_i32 : i32
    %1 = arith.addi %0, %arg1 : i32
    %c0_i32 = arith.constant 0 : i32
    %2 = arith.minsi %1, %c0_i32 : i32
    %c0_i32_0 = arith.constant 0 : i32
    %c0_i32_1 = arith.constant 0 : i32
    return %2, %c0_i32_0 : i32, i32
  }
  func.func @transform_1(%arg0: i32, %arg1: i32) -> (i32, i32) {
    %c1_i32 = arith.constant 1 : i32
    %0 = arith.muli %arg0, %c1_i32 : i32
    %1 = arith.addi %0, %arg1 : i32
    %c0_i32 = arith.constant 0 : i32
    %2 = arith.minsi %1, %c0_i32 : i32
    %c0_i32_0 = arith.constant 0 : i32
    %c0_i32_1 = arith.constant 0 : i32
    return %2, %c0_i32_0 : i32, i32
  }
  func.func @transform_2(%arg0: i32, %arg1: i32) -> (i32, i32) {
    %c0_i32 = arith.constant 0 : i32
    %c0_i32_0 = arith.constant 0 : i32
    return %arg0, %c0_i32 : i32, i32
  }
}

</mosaic_0001>

<llo_original>
// kernel: tpu_custom_call.1
$region0: #{tpu_custom_call.1}
  #allocation0 [shape = 'u32[]', space=smem, size = 0x4, offset = 0x4, fixed_abs, tag = 'smem constant byte address 0x4 - core index']
  #allocation1 [shape = 'u32[72,128]{1,0:T(1,128)}', space=vmem, size = 0x9000, scoped, tag = 'internal scratch']
  %s0 = inlined_call_operand.hbm [shape: f32[16,128], index: 0, kind: input, shape index: {}]
  %s1 = inlined_call_operand.hbm [shape: f32[16,128], index: 1, kind: input, shape index: {}]
  %s2 = inlined_call_operand.hbm [shape: f32[8,128], index: 2, kind: output, shape index: {}]
  %s3 = sld [smem:[#allocation0]]
  $region30: #{tpu_custom_call.1} parent=0
    _
  %s5 = ssub.s32 1, %s3
  %s6 = scalar_select 0, %s5, %s3
  $region1: #{tpu_custom_call.1} parent=0
    #allocation2 [shape = 'u8[8192]{0}', space=vmem, size = 0x2000, scoped, tag = 'input window, operand 0, single buffered']
    #allocation3 [shape = 's32[1]{0}', space=sflag, size = 0x4, scoped, tag = 'scoped memory for tpu_custom_call.1']
    #allocation4 [shape = 's32[1]{0}', space=sflag, size = 0x4, scoped, tag = 'scoped memory for tpu_custom_call.1']
    #allocation5 [shape = 'u8[8192]{0}', space=vmem, size = 0x2000, scoped, tag = 'input window, operand 1, single buffered']
    #allocation6 [shape = 's32[1]{0}', space=sflag, size = 0x4, scoped, tag = 'scoped memory for tpu_custom_call.1']
    #allocation7 [shape = 'u8[4096]{0}', space=vmem, size = 0x1000, scoped, tag = 'output window, operand 0, single buffered']
    %7 = vsyncpa [#allocation3], 0
    %8 = vsyncpa [#allocation6], 0
    %9 = vsyncpa [#allocation4], 0
    // Predicated region
    $region2: #{tpu_custom_call.1} parent=1 // pred_check
      _
    $region3: #{tpu_custom_call.1} parent=1 // pred_check_branch
      %11 = sbr.rel (0) target = $region5
    $region4: #{tpu_custom_call.1} parent=1 // pred_region
      %s12 = sadd.s32 0, 0
      %p13 = scmp.lt.s32.totalorder %s12, 0
      %s14 = scalar_select %p13, %s12, 0
      %s15 = smul.u32 2, %s14
      %17 = vsyncadd [#allocation3], 0
      %s18 = smul.addr %s15, 8
      %s19 = scalar_lea.hbm %s0, %s18
      %s20 = sshll.u32 %s19, 4
      %s21 = int_to_ptr.hbm [resolvable:$true] %s20
      %s22 = sshll.u32 [#allocation2], 4
      %s23 = int_to_ptr.vmem [resolvable:$true] %s22
      %28 = dma.hbm_to_vmem [thread:$0]  %s21, 256, %s23, [#allocation3], 128, 128, 8
    $region5: #{tpu_custom_call.1} parent=1 // pred_fallthru
      _
    // Predicated region
    $region6: #{tpu_custom_call.1} parent=1 // pred_check
      _
    $region7: #{tpu_custom_call.1} parent=1 // pred_check_branch
      %30 = sbr.rel (0) target = $region9
    $region8: #{tpu_custom_call.1} parent=1 // pred_region
      %s31 = sadd.s32 0, 0
      %p32 = scmp.lt.s32.totalorder %s31, 0
      %s33 = scalar_select %p32, %s31, 0
      %s34 = smul.u32 2, %s33
      %36 = vsyncadd [#allocation6], 0
      %s37 = smul.addr %s34, 8
      %s38 = scalar_lea.hbm %s1, %s37
      %s39 = sshll.u32 %s38, 4
      %s40 = int_to_ptr.hbm [resolvable:$true] %s39
      %s41 = sshll.u32 [#allocation5], 4
      %s42 = int_to_ptr.vmem [resolvable:$true] %s41
      %47 = dma.hbm_to_vmem [thread:$0]  %s40, 256, %s42, [#allocation6], 128, 128, 8
    $region9: #{tpu_custom_call.1} parent=1 // pred_fallthru
      _
    // Predicated region
    $region10: #{tpu_custom_call.1} parent=1 // pred_check
      _
    $region11: #{tpu_custom_call.1} parent=1 // pred_check_branch
      %49 = sbr.rel (0) target = $region13
    $region12: #{tpu_custom_call.1} parent=1 // pred_region
      %51 = dma.done [#allocation3], 256
    $region13: #{tpu_custom_call.1} parent=1 // pred_fallthru
      _
    // Predicated region
    $region14: #{tpu_custom_call.1} parent=1 // pred_check
      _
    $region15: #{tpu_custom_call.1} parent=1 // pred_check_branch
      %53 = sbr.rel (0) target = $region17
    $region16: #{tpu_custom_call.1} parent=1 // pred_region
      %55 = dma.done [#allocation6], 256
    $region17: #{tpu_custom_call.1} parent=1 // pred_fallthru
      _
    %s56 = sadd.s32 0, 0
    %p57 = scmp.lt.s32.totalorder %s56, 0
    %s58 = scalar_select %p57, %s56, 0
    %s59 = smul.u32 2, %s58
    %s60 = sadd.s32 0, 0
    %p61 = scmp.lt.s32.totalorder %s60, 0
    %s62 = scalar_select %p61, %s60, 0
    %s63 = smul.u32 2, %s62
    %p64 = scmp.eq.s32.totalorder 0, 0
    // Predicated region
    $region18: #{tpu_custom_call.1} parent=1 // pred_check
      %p65 = pneg %p64
    $region19: #{tpu_custom_call.1} parent=1 // pred_check_branch
      %67 = sbr.rel (%p65) target = $region21
    $region20: #{tpu_custom_call.1} parent=1 // pred_region
      %68 = vst [vmem:[#allocation7] sm:$0xff] 0.0
    $region21: #{tpu_custom_call.1} parent=1 // pred_fallthru
      _
    %v69 = vld [vmem:[#allocation2] sm:$0xff]
    %v70 = vld [vmem:[#allocation2 + $0x8] sm:$0xff]
    %v71 = vld [vmem:[#allocation5] sm:$0xff]
    %v72 = vld [vmem:[#allocation5 + $0x8] sm:$0xff]
    %v73 = vsub.f32 %v69, %v71
    %v74 = vsub.f32 %v70, %v72
    %v75 = vmul.f32 %v73, %v73
    %v76 = vmul.f32 %v74, %v74
    %v77 = vld [vmem:[#allocation7] sm:$0xff]
    %v78 = vadd.f32 %v75, %v76
    %v79 = vadd.f32 %v77, %v78
    %80 = vst [vmem:[#allocation7] sm:$0xff] %v79
    // Predicated region
    $region22: #{tpu_custom_call.1} parent=1 // pred_check
      _
    $region23: #{tpu_custom_call.1} parent=1 // pred_check_branch
      %82 = sbr.rel (0) target = $region25
    $region24: #{tpu_custom_call.1} parent=1 // pred_region
      %84 = vsyncadd [#allocation4], 0
      %s86 = sshll.u32 [#allocation7], 4
      %s87 = int_to_ptr.vmem [resolvable:$true] %s86
      %s88 = sshll.u32 %s2, 4
      %s89 = int_to_ptr.hbm [resolvable:$true] %s88
      %91 = dma.vmem_to_hbm [thread:$0]  %s87, 128, %s89, [#allocation4]
    $region25: #{tpu_custom_call.1} parent=1 // pred_fallthru
      _
    // Predicated region
    $region26: #{tpu_custom_call.1} parent=1 // pred_check
      _
    $region27: #{tpu_custom_call.1} parent=1 // pred_check_branch
      %93 = sbr.rel (0) target = $region29
    $region28: #{tpu_custom_call.1} parent=1 // pred_region
      %95 = dma.done [#allocation4], 128
    $region29: #{tpu_custom_call.1} parent=1 // pred_fallthru
      _
    %96 = vsyncpa [#allocation3], 1
    %97 = vsyncpa [#allocation6], 1
    %98 = vsyncpa [#allocation4], 1

</llo_original>
